<compile_context>
chip_gen: v7x
topology: tpu7x:2x2x1
jax: 0.10.0
libtpu: 0.0.40
codegen_flags: <defaults>
</compile_context>

<pallas_src>
import functools

import jax
import jax.numpy as jnp
from jax.experimental import pallas as pl
from jax.experimental.pallas import tpu as pltpu

ALPHA = 0.2        # LeakyReLU negative slope
NEG_BIG = -9e15    # adjacency mask fill (kept in f32)


def _project_kernel(x_ref, w_ref, a_ref, h_ref, s_ref):
    # x_ref: (TM, 3*F_in), w_ref: (3*F_in, P), a_ref: (P, 2)
    # h_ref: (TM, P)  -- tubal product, interleaved+padded lane layout
    # s_ref: (TM, 2)  -- [self score | neigh score]
    h = jnp.dot(x_ref[...], w_ref[...], preferred_element_type=jnp.float32)
    h_ref[...] = h.astype(h_ref.dtype)
    s_ref[...] = jnp.dot(h, a_ref[...], preferred_element_type=jnp.float32)


def _attention_kernel(self_ref, neigh_ref, m_ref, bias_ref, h_ref, o_ref):
    # self_ref : (TM, 1)    per-row self score
    # neigh_ref: (1, N)     neighbour scores (resident)
    # m_ref    : (TM, N)    M tile
    # bias_ref : (TM, N)    0 where adj>0 else -9e15 (additive mask)
    # h_ref    : (N, P)     resident node features (f32 or bf16)
    # o_ref    : (TM, P)    lane-dense ELU(att @ h)
    e = self_ref[...] + neigh_ref[...]                    # (TM, N), f32
    e = e * m_ref[...]
    e = jnp.maximum(e, ALPHA * e)                         # LeakyReLU
    e = e + bias_ref[...]                                 # adjacency mask
    e = e - jnp.max(e, axis=1, keepdims=True)             # exact row softmax
    p = jnp.exp(e)
    p = p * pl.reciprocal(jnp.sum(p, axis=1, keepdims=True), approx=True)
    hp = jnp.dot(p.astype(h_ref.dtype), h_ref[...],
                 preferred_element_type=jnp.float32)      # (TM, P)
    o_ref[...] = jnp.where(hp > 0, hp, jnp.exp(hp) - 1.0)  # ELU (concat=True)


@functools.partial(jax.jit, static_argnames=("compute_dtype", "block_rows"))
def gat_layer_forward(x, W, a_self, a_neighs, adj, M,
                      compute_dtype=jnp.float32, block_rows=256):
    """x: (N, F_in, 3), W: (F_in, F_out, 3), a_*: (3*F_out, 1), adj/M: (N, N).
    Returns (N, F_out, 3) = ELU(h_prime), matching the torch module (concat=True)."""
    n, f_in, _ = x.shape
    f_out = W.shape[1]
    fo3 = 3 * f_out
    p_lanes = ((fo3 + 127) // 128) * 128          # pad 3*F_out lanes to multiple of 128

    # ---- layout prep (wrapper glue; pure reshapes / tiny weight prep) -------------
    # x_flat column index = c*3 + j (same interleaving torch uses) -> pure reshape.
    x_flat = x.reshape(n, f_in * 3).astype(compute_dtype)

    # Block-circulant weight: W_circ[c*3+j, f*3+k] = W[c, f, (k-j) mod 3]
    jj = jnp.arange(3)[:, None]
    kk = jnp.arange(3)[None, :]
    w_gather = W[:, :, (kk - jj) % 3]                               # (F_in, F_out, 3j, 3k)
    w_circ = jnp.transpose(w_gather, (0, 2, 1, 3)).reshape(f_in * 3, fo3)
    w_circ = jnp.pad(w_circ, ((0, 0), (0, p_lanes - fo3))).astype(compute_dtype)

    # Fused attention projection (interleaved layout matches a_self / a_neighs as-is).
    a_proj = jnp.concatenate([a_self, a_neighs], axis=1)            # (3*F_out, 2)
    a_proj = jnp.pad(a_proj, ((0, p_lanes - fo3), (0, 0))).astype(jnp.float32)

    # Additive adjacency mask (f32; -9e15 not representable in bf16).
    bias = jnp.where(adj > 0, 0.0, NEG_BIG).astype(jnp.float32)
    m32 = M.astype(jnp.float32)

    # Row-block size: multiple of 8, sized so 2 tiles x 2 buffers of (TM, N) f32 plus the
    # resident h_flat fit the (v7x: 64 MiB) VMEM budget set below.
    tm = n if n <= block_rows else block_rows
    grid = (pl.cdiv(n, tm),)
    cparams = pltpu.CompilerParams(
        dimension_semantics=("parallel",),            # shards row blocks across v7x's 2 TCs
        vmem_limit_bytes=48 * 1024 * 1024)            # above 32 MiB default, < v7x physical

    # ---- call 1: tubal product + fused attention scores ---------------------------
    h_flat, s = pl.pallas_call(
        _project_kernel,
        grid=grid,
        in_specs=[pl.BlockSpec((tm, f_in * 3), lambda i: (i, 0)),
                  pl.BlockSpec((f_in * 3, p_lanes), lambda i: (0, 0)),
                  pl.BlockSpec((p_lanes, 2), lambda i: (0, 0))],
        out_specs=[pl.BlockSpec((tm, p_lanes), lambda i: (i, 0)),
                   pl.BlockSpec((tm, 2), lambda i: (i, 0))],
        out_shape=[jax.ShapeDtypeStruct((n, p_lanes), compute_dtype),
                   jax.ShapeDtypeStruct((n, 2), jnp.float32)],
        compiler_params=cparams,
    )(x_flat, w_circ, a_proj)

    self_col = s[:, 0:1]                       # (N, 1)
    neigh_row = jnp.transpose(s[:, 1:2])       # (1, N)  (tiny O(N) transpose in XLA)

    # ---- call 2: row-block tiled dense attention + aggregation + ELU --------------
    hp = pl.pallas_call(
        _attention_kernel,
        grid=grid,
        in_specs=[pl.BlockSpec((tm, 1), lambda i: (i, 0)),
                  pl.BlockSpec((1, n), lambda i: (0, 0)),
                  pl.BlockSpec((tm, n), lambda i: (i, 0)),
                  pl.BlockSpec((tm, n), lambda i: (i, 0)),
                  pl.BlockSpec((n, p_lanes), lambda i: (0, 0))],
        out_specs=pl.BlockSpec((tm, p_lanes), lambda i: (i, 0)),
        out_shape=jax.ShapeDtypeStruct((n, p_lanes), jnp.float32),
        compiler_params=cparams,
    )(self_col, neigh_row, m32, bias, h_flat)

    # Lane-dense padded output -> (N, F_out, 3); interleaved layout makes this a pure
    # reshape (no transpose, no extra HBM pass beyond the slice).
    return hp[:, :fo3].reshape(n, f_out, 3)


def _reference_forward(x, W, a_self, a_neighs, adj, M):
    """Plain-JAX f32 reference mirroring the torch module semantics."""
    n, f_in, _ = x.shape
    f_out = W.shape[1]
    # tt_product via circular convolution (== FFT-based product, evaluated in f32)
    h1 = jnp.zeros((n, f_out, 3), jnp.float32)
    for k in range(3):
        acc = jnp.zeros((n, f_out), jnp.float32)
        for j in range(3):
            acc = acc + x[:, :, (k - j) % 3] @ W[:, :, j]
        h1 = h1.at[:, :, k].set(acc)
    h = h1.reshape(n, f_out * 3)
    att = h @ a_self + (h @ a_neighs).T
    att = att * M
    att = jnp.where(att >= 0, att, ALPHA * att)
    att = jnp.where(adj > 0, att, NEG_BIG)
    att = jax.nn.softmax(att, axis=1)
    h_prime = (att @ h).reshape(n, f_out, 3)
    return jnp.where(h_prime > 0, h_prime, jnp.exp(h_prime) - 1.0)


def _xavier_uniform(key, shape, gain=1.414):
    if len(shape) == 2:
        fan_in, fan_out = shape[0], shape[1]
    else:  # torch convention for >2D tensors
        rf = 1
        for d in shape[2:]:
            rf *= d
        fan_in, fan_out = shape[1] * rf, shape[0] * rf
    a = gain * (6.0 / (fan_in + fan_out)) ** 0.5
    return jax.random.uniform(key, shape, jnp.float32, -a, a)


if __name__ == "__main__":
    key = jax.random.PRNGKey(0)
    k_w, k_as, k_an, k_x, k_adj, k_m = jax.random.split(key, 6)

    N, F_IN, F_OUT = 8, 16, 32

    W = _xavier_uniform(k_w, (F_IN, F_OUT, 3))
    a_self = _xavier_uniform(k_as, (F_OUT * 3, 1))
    a_neighs = _xavier_uniform(k_an, (F_OUT * 3, 1))

    x = jax.random.normal(k_x, (N, F_IN, 3), jnp.float32)
    adj = (jax.random.uniform(k_adj, (N, N)) > 0.5).astype(jnp.float32)
    adj = jnp.maximum(adj, jnp.eye(N, dtype=jnp.float32))  # self-loops
    M = jax.random.uniform(k_m, (N, N), jnp.float32)

    ref = _reference_forward(x, W, a_self, a_neighs, adj, M)

    # f32 MXU inputs: tight check
    out32 = jax.block_until_ready(
        gat_layer_forward(x, W, a_self, a_neighs, adj, M,
                          compute_dtype=jnp.float32))
    assert out32.shape == (N, F_OUT, 3)
    assert jnp.all(jnp.isfinite(out32))
    assert jnp.allclose(out32, ref, rtol=5e-3, atol=1e-3), (
        "f32 max err", float(jnp.max(jnp.abs(out32 - ref))))

    # bf16 MXU inputs (f32 accumulation / softmax / mask): relaxed check
    out16 = jax.block_until_ready(
        gat_layer_forward(x, W, a_self, a_neighs, adj, M,
                          compute_dtype=jnp.bfloat16))
    assert out16.shape == (N, F_OUT, 3)
    assert jnp.all(jnp.isfinite(out16))
    assert jnp.allclose(out16, ref, rtol=1e-1, atol=2e-2), (
        "bf16 max err", float(jnp.max(jnp.abs(out16 - ref))))

    print("KERNEL_OK")
</pallas_src>

<mosaic_0001>
module attributes {stable_mosaic.version = 11 : i64} {
  func.func @_project_kernel(%arg0: i32, %arg1: memref<8x48xf32, #tpu.memory_space<vmem>>, %arg2: memref<48x128xf32, #tpu.memory_space<vmem>>, %arg3: memref<128x2xf32, #tpu.memory_space<vmem>>, %arg4: memref<8x128xf32, #tpu.memory_space<vmem>>, %arg5: memref<8x2xf32, #tpu.memory_space<vmem>>) attributes {dimension_semantics = [#tpu.dimension_semantics<parallel>], iteration_bounds = array<i64: 1>, scalar_prefetch = 0 : i64, scratch_operands = 0 : i64, tpu.core_type = #tpu.core_type<tc>, window_params = [{transform_indices = @transform_0, window_bounds = array<i64: 8, 48>}, {pipeline_mode = #tpu.pipeline_mode<synchronous>, transform_indices = @transform_1, window_bounds = array<i64: 48, 128>}, {pipeline_mode = #tpu.pipeline_mode<synchronous>, transform_indices = @transform_2, window_bounds = array<i64: 128, 2>}, {transform_indices = @transform_3, window_bounds = array<i64: 8, 128>}, {transform_indices = @transform_4, window_bounds = array<i64: 8, 2>}]} {
    %c0 = arith.constant 0 : index
    %c0_0 = arith.constant 0 : index
    %0 = vector.load %arg1[%c0, %c0_0] : memref<8x48xf32, #tpu.memory_space<vmem>>, vector<8x48xf32>
    %c0_1 = arith.constant 0 : index
    %c0_2 = arith.constant 0 : index
    %1 = vector.load %arg2[%c0_1, %c0_2] : memref<48x128xf32, #tpu.memory_space<vmem>>, vector<48x128xf32>
    %cst = arith.constant dense<0.000000e+00> : vector<8x128xf32>
    %2 = tpu.matmul %0, %1, %cst {dimension_numbers = #tpu.dot_dimension_numbers<[1], [0], [0], [1], [0, 0, 1, 1], [], []>} : vector<8x48xf32>, vector<48x128xf32>, vector<8x128xf32> -> vector<8x128xf32>
    %c0_3 = arith.constant 0 : index
    %c0_4 = arith.constant 0 : index
    %3 = vector.load %arg4[%c0_3, %c0_4] : memref<8x128xf32, #tpu.memory_space<vmem>>, vector<8x128xf32>
    tpu.vector_store %arg4[%c0_3, %c0_4], %2 {strides = array<i32>} : memref<8x128xf32, #tpu.memory_space<vmem>>, vector<8x128xf32>,
    %c0_5 = arith.constant 0 : index
    %c0_6 = arith.constant 0 : index
    %4 = vector.load %arg3[%c0_5, %c0_6] : memref<128x2xf32, #tpu.memory_space<vmem>>, vector<128x2xf32>
    %cst_7 = arith.constant dense<0.000000e+00> : vector<8x2xf32>
    %5 = tpu.matmul %2, %4, %cst_7 {dimension_numbers = #tpu.dot_dimension_numbers<[1], [0], [0], [1], [0, 0, 1, 1], [], []>} : vector<8x128xf32>, vector<128x2xf32>, vector<8x2xf32> -> vector<8x2xf32>
    %c0_8 = arith.constant 0 : index
    %c0_9 = arith.constant 0 : index
    %6 = vector.load %arg5[%c0_8, %c0_9] : memref<8x2xf32, #tpu.memory_space<vmem>>, vector<8x2xf32>
    tpu.vector_store %arg5[%c0_8, %c0_9], %5 {strides = array<i32>} : memref<8x2xf32, #tpu.memory_space<vmem>>, vector<8x2xf32>,
    return
  }
  func.func @transform_0(%arg0: i32) -> (i32, i32) {
    %c0_i32 = arith.constant 0 : i32
    %c0_i32_0 = arith.constant 0 : i32
    return %arg0, %c0_i32 : i32, i32
  }
  func.func @transform_1(%arg0: i32) -> (i32, i32) {
    %c0_i32 = arith.constant 0 : i32
    %c0_i32_0 = arith.constant 0 : i32
    %c0_i32_1 = arith.constant 0 : i32
    return %c0_i32, %c0_i32_0 : i32, i32
  }
  func.func @transform_2(%arg0: i32) -> (i32, i32) {
    %c0_i32 = arith.constant 0 : i32
    %c0_i32_0 = arith.constant 0 : i32
    %c0_i32_1 = arith.constant 0 : i32
    return %c0_i32, %c0_i32_0 : i32, i32
  }
  func.func @transform_3(%arg0: i32) -> (i32, i32) {
    %c0_i32 = arith.constant 0 : i32
    %c0_i32_0 = arith.constant 0 : i32
    return %arg0, %c0_i32 : i32, i32
  }
  func.func @transform_4(%arg0: i32) -> (i32, i32) {
    %c0_i32 = arith.constant 0 : i32
    %c0_i32_0 = arith.constant 0 : i32
    return %arg0, %c0_i32 : i32, i32
  }
}

module attributes {stable_mosaic.version = 11 : i64} {
  func.func @_attention_kernel(%arg0: i32, %arg1: memref<8x1xf32, #tpu.memory_space<vmem>>, %arg2: memref<1x8xf32, #tpu.memory_space<vmem>>, %arg3: memref<8x8xf32, #tpu.memory_space<vmem>>, %arg4: memref<8x8xf32, #tpu.memory_space<vmem>>, %arg5: memref<8x128xf32, #tpu.memory_space<vmem>>, %arg6: memref<8x128xf32, #tpu.memory_space<vmem>>) attributes {dimension_semantics = [#tpu.dimension_semantics<parallel>], iteration_bounds = array<i64: 1>, scalar_prefetch = 0 : i64, scratch_operands = 0 : i64, tpu.core_type = #tpu.core_type<tc>, window_params = [{transform_indices = @transform_0, window_bounds = array<i64: 8, 1>}, {pipeline_mode = #tpu.pipeline_mode<synchronous>, transform_indices = @transform_1, window_bounds = array<i64: 1, 8>}, {transform_indices = @transform_2, window_bounds = array<i64: 8, 8>}, {transform_indices = @transform_3, window_bounds = array<i64: 8, 8>}, {pipeline_mode = #tpu.pipeline_mode<synchronous>, transform_indices = @transform_4, window_bounds = array<i64: 8, 128>}, {transform_indices = @transform_5, window_bounds = array<i64: 8, 128>}]} {
    %c0 = arith.constant 0 : index
    %c0_0 = arith.constant 0 : index
    %0 = vector.load %arg1[%c0, %c0_0] : memref<8x1xf32, #tpu.memory_space<vmem>>, vector<8x1xf32>
    %c0_1 = arith.constant 0 : index
    %c0_2 = arith.constant 0 : index
    %1 = vector.load %arg2[%c0_1, %c0_2] : memref<1x8xf32, #tpu.memory_space<vmem>>, vector<1x8xf32>
    %2 = vector.broadcast %0 : vector<8x1xf32> to vector<8x8xf32>
    %3 = vector.broadcast %1 : vector<1x8xf32> to vector<8x8xf32>
    %4 = arith.addf %2, %3 : vector<8x8xf32>
    %c0_3 = arith.constant 0 : index
    %c0_4 = arith.constant 0 : index
    %5 = vector.load %arg3[%c0_3, %c0_4] : memref<8x8xf32, #tpu.memory_space<vmem>>, vector<8x8xf32>
    %6 = arith.mulf %4, %5 : vector<8x8xf32>
    %cst = arith.constant 2.000000e-01 : f32
    %7 = vector.broadcast %cst : f32 to vector<8x8xf32>
    %8 = arith.mulf %7, %6 : vector<8x8xf32>
    %9 = arith.maximumf %6, %8 : vector<8x8xf32>
    %c0_5 = arith.constant 0 : index
    %c0_6 = arith.constant 0 : index
    %10 = vector.load %arg4[%c0_5, %c0_6] : memref<8x8xf32, #tpu.memory_space<vmem>>, vector<8x8xf32>
    %11 = arith.addf %9, %10 : vector<8x8xf32>
    %cst_7 = arith.constant dense<0xFF800000> : vector<8xf32>
    %12 = vector.multi_reduction <maximumf>, %11, %cst_7 [1] : vector<8x8xf32> to vector<8xf32>
    %13 = vector.shape_cast %12 : vector<8xf32> to vector<8x1xf32>
    %14 = vector.broadcast %13 : vector<8x1xf32> to vector<8x8xf32>
    %15 = arith.subf %11, %14 : vector<8x8xf32>
    %16 = math.exp %15 : vector<8x8xf32>
    %cst_8 = arith.constant dense<0.000000e+00> : vector<8xf32>
    %17 = vector.multi_reduction <add>, %16, %cst_8 [1] : vector<8x8xf32> to vector<8xf32>
    %18 = vector.shape_cast %17 : vector<8xf32> to vector<8x1xf32>
    %19 = tpu.reciprocal %18 {approx = true} : vector<8x1xf32> -> vector<8x1xf32>
    %20 = vector.broadcast %19 : vector<8x1xf32> to vector<8x8xf32>
    %21 = arith.mulf %16, %20 : vector<8x8xf32>
    %c0_9 = arith.constant 0 : index
    %c0_10 = arith.constant 0 : index
    %22 = vector.load %arg5[%c0_9, %c0_10] : memref<8x128xf32, #tpu.memory_space<vmem>>, vector<8x128xf32>
    %cst_11 = arith.constant dense<0.000000e+00> : vector<8x128xf32>
    %23 = tpu.matmul %21, %22, %cst_11 {dimension_numbers = #tpu.dot_dimension_numbers<[1], [0], [0], [1], [0, 0, 1, 1], [], []>} : vector<8x8xf32>, vector<8x128xf32>, vector<8x128xf32> -> vector<8x128xf32>
    %cst_12 = arith.constant 0.000000e+00 : f32
    %24 = vector.broadcast %cst_12 : f32 to vector<8x128xf32>
    %25 = arith.cmpf ogt, %23, %24 : vector<8x128xf32>
    %26 = math.exp %23 : vector<8x128xf32>
    %cst_13 = arith.constant 1.000000e+00 : f32
    %27 = vector.broadcast %cst_13 : f32 to vector<8x128xf32>
    %28 = arith.subf %26, %27 : vector<8x128xf32>
    %29 = arith.select %25, %23, %28 : vector<8x128xi1>, vector<8x128xf32>
    %c0_14 = arith.constant 0 : index
    %c0_15 = arith.constant 0 : index
    %30 = vector.load %arg6[%c0_14, %c0_15] : memref<8x128xf32, #tpu.memory_space<vmem>>, vector<8x128xf32>
    tpu.vector_store %arg6[%c0_14, %c0_15], %29 {strides = array<i32>} : memref<8x128xf32, #tpu.memory_space<vmem>>, vector<8x128xf32>,
    return
  }
  func.func @transform_0(%arg0: i32) -> (i32, i32) {
    %c0_i32 = arith.constant 0 : i32
    %c0_i32_0 = arith.constant 0 : i32
    return %arg0, %c0_i32 : i32, i32
  }
  func.func @transform_1(%arg0: i32) -> (i32, i32) {
    %c0_i32 = arith.constant 0 : i32
    %c0_i32_0 = arith.constant 0 : i32
    %c0_i32_1 = arith.constant 0 : i32
    return %c0_i32, %c0_i32_0 : i32, i32
  }
  func.func @transform_2(%arg0: i32) -> (i32, i32) {
    %c0_i32 = arith.constant 0 : i32
    %c0_i32_0 = arith.constant 0 : i32
    return %arg0, %c0_i32 : i32, i32
  }
  func.func @transform_3(%arg0: i32) -> (i32, i32) {
    %c0_i32 = arith.constant 0 : i32
    %c0_i32_0 = arith.constant 0 : i32
    return %arg0, %c0_i32 : i32, i32
  }
  func.func @transform_4(%arg0: i32) -> (i32, i32) {
    %c0_i32 = arith.constant 0 : i32
    %c0_i32_0 = arith.constant 0 : i32
    %c0_i32_1 = arith.constant 0 : i32
    return %c0_i32, %c0_i32_0 : i32, i32
  }
  func.func @transform_5(%arg0: i32) -> (i32, i32) {
    %c0_i32 = arith.constant 0 : i32
    %c0_i32_0 = arith.constant 0 : i32
    return %arg0, %c0_i32 : i32, i32
  }
}

</mosaic_0001>

<llo_original>
// kernel: gat_layer_forward.3
$region0: #{gat_layer_forward.3}
  #allocation0 [shape = 'u32[]', space=smem, size = 0x4, offset = 0x4, fixed_abs, tag = 'smem constant byte address 0x4 - core index']
  #allocation1 [shape = 'u32[144,128]{1,0:T(1,128)}', space=vmem, size = 0x12000, scoped, tag = 'internal scratch']
  %s0 = inlined_call_operand.vmem [shape: f32[8,1], index: 0, kind: input, shape index: {}]
  %s1 = inlined_call_operand.vmem [shape: f32[1,8], index: 1, kind: input, shape index: {}]
  %s2 = inlined_call_operand.vmem [shape: f32[8,8], index: 2, kind: input, shape index: {}]
  %s3 = inlined_call_operand.vmem [shape: f32[8,8], index: 3, kind: input, shape index: {}]
  %s4 = inlined_call_operand.vmem [shape: f32[8,128], index: 4, kind: input, shape index: {}]
  %s5 = inlined_call_operand.vmem [shape: f32[8,128], index: 5, kind: output, shape index: {}]
  %s6 = sld [smem:[#allocation0]]
  $region30: #{gat_layer_forward.3} parent=0
    _
  %s8 = ssub.s32 1, %s6
  %s9 = scalar_select 0, %s8, %s6
  // Predicated region
  $region2: #{gat_layer_forward.3} parent=0 // pred_check
    _
  $region3: #{gat_layer_forward.3} parent=0 // pred_check_branch
    %11 = sbr.rel (0) target = $region5
  $region4: #{gat_layer_forward.3} parent=0 // pred_region
    _
  $region5: #{gat_layer_forward.3} parent=0 // pred_fallthru
    _
  // Predicated region
  $region6: #{gat_layer_forward.3} parent=0 // pred_check
    _
  $region7: #{gat_layer_forward.3} parent=0 // pred_check_branch
    %13 = sbr.rel (0) target = $region9
  $region8: #{gat_layer_forward.3} parent=0 // pred_region
    _
  $region9: #{gat_layer_forward.3} parent=0 // pred_fallthru
    _
  // Predicated region
  $region10: #{gat_layer_forward.3} parent=0 // pred_check
    _
  $region11: #{gat_layer_forward.3} parent=0 // pred_check_branch
    %15 = sbr.rel (0) target = $region13
  $region12: #{gat_layer_forward.3} parent=0 // pred_region
    _
  $region13: #{gat_layer_forward.3} parent=0 // pred_fallthru
    _
  // Predicated region
  $region14: #{gat_layer_forward.3} parent=0 // pred_check
    _
  $region15: #{gat_layer_forward.3} parent=0 // pred_check_branch
    %17 = sbr.rel (0) target = $region17
  $region16: #{gat_layer_forward.3} parent=0 // pred_region
    _
  $region17: #{gat_layer_forward.3} parent=0 // pred_fallthru
    _
  // Predicated region
  $region18: #{gat_layer_forward.3} parent=0 // pred_check
    _
  $region19: #{gat_layer_forward.3} parent=0 // pred_check_branch
    %19 = sbr.rel (0) target = $region21
  $region20: #{gat_layer_forward.3} parent=0 // pred_region
    _
  $region21: #{gat_layer_forward.3} parent=0 // pred_fallthru
    _
  %v20 = vld [vmem:[%s0] sm:$0xff]
  %v21 = vld [vmem:[%s1] sm:$0x1]
  %23 = vset.pattern.permute.xlu0 0
  %24 = vperm.xlu0 %23, %v20
  %v25 = vpop.permute.xlu0 %24
  %v28 = vlaneseq
  %v29 = vshrl.u32 %v28, 7
  %v30 = vsub.s32 0, %v29
  %v31 = vrot.slane %v21, %v30
  %v33 = vadd.f32 %v25, %v31
  %v34 = vld [vmem:[%s2] sm:$0xff]
  %v35 = vmul.f32 %v33, %v34
  %v36 = vmul.f32 %v35, 0.2
  %v37 = vmax.f32 %v35, %v36
  %v38 = vld [vmem:[%s3] sm:$0xff]
  %v39 = vadd.f32 %v37, %v38
  %vm40 = vcmask 64512
  %v41 = vsel %vm40, %v39, -inf
  %42 = vmax.xlane.f32.xlu0 %v41
  %v43 = vpop.xlane.xlu0 %42
  %v44 = vsub.f32 %v39, %v43
  %v45 = vmul.f32 %v44, 1.442695
  %v46 = vpow.pop %v45
  %v47 = vsel %vm40, %v46, 0.0
  %48 = vadd.xlane.f32.xlu0 %v47
  %v49 = vpop.xlane.xlu0 %48
  %v50 = vrcp.pop %v49
  %v51 = vmul.f32 %v46, %v50
  %v52 = vld [vmem:[%s4] sm:$0xff]
  %v54 = vsel %vm40, %v51, 0
  %56 = vmatprep.subr.mxu0 0.0
  %57 = vmatpush1.msra.mxu0 %v52
  %58 = vmatprep.subr.mxu0 0.0
  %59 = vmatpush1.msra.mxu0 0.0
  %60 = vmatprep.subr.mxu0 0.0
  %61 = vmatpush1.msra.mxu0 0.0
  %62 = vmatprep.subr.mxu0 0.0
  %63 = vmatpush1.msra.mxu0 0.0
  %64 = vmatprep.subr.mxu0 0.0
  %65 = vmatpush1.msra.mxu0 0.0
  %66 = vmatprep.subr.mxu0 0.0
  %67 = vmatpush1.msra.mxu0 0.0
  %68 = vmatprep.subr.mxu0 0.0
  %69 = vmatpush1.msra.mxu0 0.0
  %70 = vmatprep.subr.mxu0 0.0
  %71 = vmatpush1.msra.mxu0 0.0
  %72 = vmatprep.subr.mxu0 0.0
  %73 = vmatpush1.msra.mxu0 0.0
  %74 = vmatprep.subr.mxu0 0.0
  %75 = vmatpush1.msra.mxu0 0.0
  %76 = vmatprep.subr.mxu0 0.0
  %77 = vmatpush1.msra.mxu0 0.0
  %78 = vmatprep.subr.mxu0 0.0
  %79 = vmatpush1.msra.mxu0 0.0
  %80 = vmatprep.subr.mxu0 0.0
  %81 = vmatpush1.msra.mxu0 0.0
  %82 = vmatprep.subr.mxu0 0.0
  %83 = vmatpush1.msra.mxu0 0.0
  %84 = vmatprep.subr.mxu0 0.0
  %85 = vmatpush1.msra.mxu0 0.0
  %86 = vmatprep.subr.mxu0 0.0
  %87 = vmatpush1.msra.mxu0 0.0
  %88 = vmatprep.subr.mxu0 0.0
  %89 = vmatpush1.msra.mxu0 0.0
  %90 = vmatprep.subr.mxu0 0.0
  %91 = vmatpush1.msra.mxu0 0.0
  %92 = vmatprep.subr.mxu0 0.0
  %93 = vmatpush1.msra.mxu0 0.0
  %94 = vmatprep.subr.mxu0 0.0
  %95 = vmatpush1.msra.mxu0 0.0
  %96 = vmatprep.subr.mxu0 0.0
  %97 = vmatpush1.msra.mxu0 0.0
  %98 = vmatprep.subr.mxu0 0.0
  %99 = vmatpush1.msra.mxu0 0.0
  %100 = vmatprep.subr.mxu0 0.0
  %101 = vmatpush1.msra.mxu0 0.0
  %102 = vmatprep.subr.mxu0 0.0
  %103 = vmatpush1.msra.mxu0 0.0
  %104 = vmatprep.subr.mxu0 0.0
  %105 = vmatpush1.msra.mxu0 0.0
  %106 = vmatprep.subr.mxu0 0.0
  %107 = vmatpush1.msra.mxu0 0.0
  %108 = vmatprep.subr.mxu0 0.0
  %109 = vmatpush1.msra.mxu0 0.0
  %110 = vmatprep.subr.mxu0 0.0
  %111 = vmatpush1.msra.mxu0 0.0
  %112 = vmatprep.subr.mxu0 0.0
  %113 = vmatpush1.msra.mxu0 0.0
  %114 = vmatprep.subr.mxu0 0.0
  %115 = vmatpush1.msra.mxu0 0.0
  %116 = vmatprep.subr.mxu0 0.0
  %117 = vmatpush1.msra.mxu0 0.0
  %118 = vmatprep.subr.mxu0 0.0
  %119 = vmatpush1.msra.mxu0 0.0
  %120 = vmatprep.mubr.f32.mxu0 0.0
  %121 = vmatmul.mubr.f32.gmra.mrb[0].mxu0 %v54
  %v122 = vpop.f32.mrb[0].mxu0
  %v123 = vadd.f32 0.0, %v122
  %v124 = vpop.f32.mrb[0].mxu0
  %125 = vdwg.mxu0
  %vm126 = vcmp.gt.f32.partialorder %v123, 0.0
  %v127 = vmul.f32 %v123, 1.442695
  %v128 = vpow.pop %v127
  %v129 = vsub.f32 %v128, 1.0
  %v130 = vsel %vm126, %v123, %v129
  %131 = vst [vmem:[%s5] sm:$0xff] %v130
  // Predicated region
  $region22: #{gat_layer_forward.3} parent=0 // pred_check
    _
  $region23: #{gat_layer_forward.3} parent=0 // pred_check_branch
    %133 = sbr.rel (0) target = $region25
  $region24: #{gat_layer_forward.3} parent=0 // pred_region
    _
  $region25: #{gat_layer_forward.3} parent=0 // pred_fallthru
    _
  // Predicated region
  $region26: #{gat_layer_forward.3} parent=0 // pred_check
    _
  $region27: #{gat_layer_forward.3} parent=0 // pred_check_branch
    %135 = sbr.rel (0) target = $region29
  $region28: #{gat_layer_forward.3} parent=0 // pred_region
    _
  $region29: #{gat_layer_forward.3} parent=0 // pred_fallthru
    _

// kernel: gat_layer_forward.2
$region0: #{gat_layer_forward.2}
  #allocation0 [shape = 'u32[]', space=smem, size = 0x4, offset = 0x4, fixed_abs, tag = 'smem constant byte address 0x4 - core index']
  #allocation1 [shape = 'u32[144,128]{1,0:T(1,128)}', space=vmem, size = 0x12000, scoped, tag = 'internal scratch']
  %s0 = inlined_call_operand.vmem [shape: f32[8,48], index: 0, kind: input, shape index: {}]
  %s1 = inlined_call_operand.vmem [shape: f32[48,128], index: 1, kind: input, shape index: {}]
  %s2 = inlined_call_operand.vmem [shape: f32[128,2], index: 2, kind: input, shape index: {}]
  %s3 = inlined_call_operand.vmem [shape: f32[8,128], index: 3, kind: output, shape index: {0}]
  %s4 = inlined_call_operand.vmem [shape: f32[8,2], index: 4, kind: output, shape index: {1}]
  %5 = xla_tuple %s3, %s4
  %s6 = sld [smem:[#allocation0]]
  $region30: #{gat_layer_forward.2} parent=0
    _
  %s8 = ssub.s32 1, %s6
  %s9 = scalar_select 0, %s8, %s6
  // Predicated region
  $region2: #{gat_layer_forward.2} parent=0 // pred_check
    _
  $region3: #{gat_layer_forward.2} parent=0 // pred_check_branch
    %11 = sbr.rel (0) target = $region5
  $region4: #{gat_layer_forward.2} parent=0 // pred_region
    _
  $region5: #{gat_layer_forward.2} parent=0 // pred_fallthru
    _
  // Predicated region
  $region6: #{gat_layer_forward.2} parent=0 // pred_check
    _
  $region7: #{gat_layer_forward.2} parent=0 // pred_check_branch
    %13 = sbr.rel (0) target = $region9
  $region8: #{gat_layer_forward.2} parent=0 // pred_region
    _
  $region9: #{gat_layer_forward.2} parent=0 // pred_fallthru
    _
  // Predicated region
  $region10: #{gat_layer_forward.2} parent=0 // pred_check
    _
  $region11: #{gat_layer_forward.2} parent=0 // pred_check_branch
    %15 = sbr.rel (0) target = $region13
  $region12: #{gat_layer_forward.2} parent=0 // pred_region
    _
  $region13: #{gat_layer_forward.2} parent=0 // pred_fallthru
    _
  %v16 = vld [vmem:[%s0] sm:$0xff]
  %v17 = vld [vmem:[%s1] sm:$0xff]
  %v18 = vld [vmem:[%s1 + $0x8] sm:$0xff]
  %v19 = vld [vmem:[%s1 + $0x10] sm:$0xff]
  %v20 = vld [vmem:[%s1 + $0x18] sm:$0xff]
  %v21 = vld [vmem:[%s1 + $0x20] sm:$0xff]
  %v22 = vld [vmem:[%s1 + $0x28] sm:$0xff]
  %vm23 = vcmask 392192
  %v25 = vsel %vm23, %v16, 0
  %27 = vmatprep.subr.mxu0 0.0
  %28 = vmatpush1.msra.mxu0 %v17
  %29 = vmatprep.subr.mxu0 0.0
  %30 = vmatpush1.msra.mxu0 %v18
  %31 = vmatprep.subr.mxu0 0.0
  %32 = vmatpush1.msra.mxu0 %v19
  %33 = vmatprep.subr.mxu0 0.0
  %34 = vmatpush1.msra.mxu0 %v20
  %35 = vmatprep.subr.mxu0 0.0
  %36 = vmatpush1.msra.mxu0 %v21
  %37 = vmatprep.subr.mxu0 0.0
  %38 = vmatpush1.msra.mxu0 %v22
  %39 = vmatprep.subr.mxu0 0.0
  %40 = vmatpush1.msra.mxu0 0.0
  %41 = vmatprep.subr.mxu0 0.0
  %42 = vmatpush1.msra.mxu0 0.0
  %43 = vmatprep.subr.mxu0 0.0
  %44 = vmatpush1.msra.mxu0 0.0
  %45 = vmatprep.subr.mxu0 0.0
  %46 = vmatpush1.msra.mxu0 0.0
  %47 = vmatprep.subr.mxu0 0.0
  %48 = vmatpush1.msra.mxu0 0.0
  %49 = vmatprep.subr.mxu0 0.0
  %50 = vmatpush1.msra.mxu0 0.0
  %51 = vmatprep.subr.mxu0 0.0
  %52 = vmatpush1.msra.mxu0 0.0
  %53 = vmatprep.subr.mxu0 0.0
  %54 = vmatpush1.msra.mxu0 0.0
  %55 = vmatprep.subr.mxu0 0.0
  %56 = vmatpush1.msra.mxu0 0.0
  %57 = vmatprep.subr.mxu0 0.0
  %58 = vmatpush1.msra.mxu0 0.0
  %59 = vmatprep.subr.mxu0 0.0
  %60 = vmatpush1.msra.mxu0 0.0
  %61 = vmatprep.subr.mxu0 0.0
  %62 = vmatpush1.msra.mxu0 0.0
  %63 = vmatprep.subr.mxu0 0.0
  %64 = vmatpush1.msra.mxu0 0.0
  %65 = vmatprep.subr.mxu0 0.0
  %66 = vmatpush1.msra.mxu0 0.0
  %67 = vmatprep.subr.mxu0 0.0
  %68 = vmatpush1.msra.mxu0 0.0
  %69 = vmatprep.subr.mxu0 0.0
  %70 = vmatpush1.msra.mxu0 0.0
  %71 = vmatprep.subr.mxu0 0.0
  %72 = vmatpush1.msra.mxu0 0.0
  %73 = vmatprep.subr.mxu0 0.0
  %74 = vmatpush1.msra.mxu0 0.0
  %75 = vmatprep.subr.mxu0 0.0
  %76 = vmatpush1.msra.mxu0 0.0
  %77 = vmatprep.subr.mxu0 0.0
  %78 = vmatpush1.msra.mxu0 0.0
  %79 = vmatprep.subr.mxu0 0.0
  %80 = vmatpush1.msra.mxu0 0.0
  %81 = vmatprep.subr.mxu0 0.0
  %82 = vmatpush1.msra.mxu0 0.0
  %83 = vmatprep.subr.mxu0 0.0
  %84 = vmatpush1.msra.mxu0 0.0
  %85 = vmatprep.subr.mxu0 0.0
  %86 = vmatpush1.msra.mxu0 0.0
  %87 = vmatprep.subr.mxu0 0.0
  %88 = vmatpush1.msra.mxu0 0.0
  %89 = vmatprep.subr.mxu0 0.0
  %90 = vmatpush1.msra.mxu0 0.0
  %91 = vmatprep.mubr.f32.mxu0 0.0
  %92 = vmatmul.mubr.f32.gmra.mrb[0].mxu0 %v25
  %v93 = vpop.f32.mrb[0].mxu0
  %v94 = vadd.f32 0.0, %v93
  %v95 = vpop.f32.mrb[0].mxu0
  %96 = vdwg.mxu0
  %97 = vst [vmem:[%s3] sm:$0xff] %v94
  %v98 = vld [vmem:[%s2] sm:$0xff]
  %v99 = vld [vmem:[%s2 + $0x8] sm:$0xff]
  %v100 = vld [vmem:[%s2 + $0x10] sm:$0xff]
  %v101 = vld [vmem:[%s2 + $0x18] sm:$0xff]
  %v102 = vld [vmem:[%s2 + $0x20] sm:$0xff]
  %v103 = vld [vmem:[%s2 + $0x28] sm:$0xff]
  %v104 = vld [vmem:[%s2 + $0x30] sm:$0xff]
  %v105 = vld [vmem:[%s2 + $0x38] sm:$0xff]
  %v106 = vld [vmem:[%s2 + $0x40] sm:$0xff]
  %v107 = vld [vmem:[%s2 + $0x48] sm:$0xff]
  %v108 = vld [vmem:[%s2 + $0x50] sm:$0xff]
  %v109 = vld [vmem:[%s2 + $0x58] sm:$0xff]
  %v110 = vld [vmem:[%s2 + $0x60] sm:$0xff]
  %v111 = vld [vmem:[%s2 + $0x68] sm:$0xff]
  %v112 = vld [vmem:[%s2 + $0x70] sm:$0xff]
  %v113 = vld [vmem:[%s2 + $0x78] sm:$0xff]
  %114 = vmatprep.subr.mxu0 0.0
  %115 = vmatpush1.msra.mxu0 %v98
  %116 = vmatprep.subr.mxu0 0.0
  %117 = vmatpush1.msra.mxu0 %v99
  %118 = vmatprep.subr.mxu0 0.0
  %119 = vmatpush1.msra.mxu0 %v100
  %120 = vmatprep.subr.mxu0 0.0
  %121 = vmatpush1.msra.mxu0 %v101
  %122 = vmatprep.subr.mxu0 0.0
  %123 = vmatpush1.msra.mxu0 %v102
  %124 = vmatprep.subr.mxu0 0.0
  %125 = vmatpush1.msra.mxu0 %v103
  %126 = vmatprep.subr.mxu0 0.0
  %127 = vmatpush1.msra.mxu0 %v104
  %128 = vmatprep.subr.mxu0 0.0
  %129 = vmatpush1.msra.mxu0 %v105
  %130 = vmatprep.subr.mxu0 0.0
  %131 = vmatpush1.msra.mxu0 %v106
  %132 = vmatprep.subr.mxu0 0.0
  %133 = vmatpush1.msra.mxu0 %v107
  %134 = vmatprep.subr.mxu0 0.0
  %135 = vmatpush1.msra.mxu0 %v108
  %136 = vmatprep.subr.mxu0 0.0
  %137 = vmatpush1.msra.mxu0 %v109
  %138 = vmatprep.subr.mxu0 0.0
  %139 = vmatpush1.msra.mxu0 %v110
  %140 = vmatprep.subr.mxu0 0.0
  %141 = vmatpush1.msra.mxu0 %v111
  %142 = vmatprep.subr.mxu0 0.0
  %143 = vmatpush1.msra.mxu0 %v112
  %144 = vmatprep.subr.mxu0 0.0
  %145 = vmatpush1.msra.mxu0 %v113
  %146 = vmatprep.subr.mxu0 0.0
  %147 = vmatpush1.msra.mxu0 0.0
  %148 = vmatprep.subr.mxu0 0.0
  %149 = vmatpush1.msra.mxu0 0.0
  %150 = vmatprep.subr.mxu0 0.0
  %151 = vmatpush1.msra.mxu0 0.0
  %152 = vmatprep.subr.mxu0 0.0
  %153 = vmatpush1.msra.mxu0 0.0
  %154 = vmatprep.subr.mxu0 0.0
  %155 = vmatpush1.msra.mxu0 0.0
  %156 = vmatprep.subr.mxu0 0.0
  %157 = vmatpush1.msra.mxu0 0.0
  %158 = vmatprep.subr.mxu0 0.0
  %159 = vmatpush1.msra.mxu0 0.0
  %160 = vmatprep.subr.mxu0 0.0
  %161 = vmatpush1.msra.mxu0 0.0
  %162 = vmatprep.subr.mxu0 0.0
  %163 = vmatpush1.msra.mxu0 0.0
  %164 = vmatprep.subr.mxu0 0.0
  %165 = vmatpush1.msra.mxu0 0.0
  %166 = vmatprep.subr.mxu0 0.0
  %167 = vmatpush1.msra.mxu0 0.0
  %168 = vmatprep.subr.mxu0 0.0
  %169 = vmatpush1.msra.mxu0 0.0
  %170 = vmatprep.subr.mxu0 0.0
  %171 = vmatpush1.msra.mxu0 0.0
  %172 = vmatprep.subr.mxu0 0.0
  %173 = vmatpush1.msra.mxu0 0.0
  %174 = vmatprep.subr.mxu0 0.0
  %175 = vmatpush1.msra.mxu0 0.0
  %176 = vmatprep.subr.mxu0 0.0
  %177 = vmatpush1.msra.mxu0 0.0
  %178 = vmatprep.mubr.f32.mxu0 0.0
  %179 = vmatmul.mubr.f32.gmra.mrb[0].mxu0 %v94
  %v180 = vpop.f32.mrb[0].mxu0
  %v181 = vadd.f32 0.0, %v180
  %v182 = vpop.f32.mrb[0].mxu0
  %183 = vdwg.mxu0
  %vm184 = vcmask 15360
  %185 = vst.msk [vmem:[%s4] sm:$0xff] %vm184, %v181
  // Predicated region
  $region14: #{gat_layer_forward.2} parent=0 // pred_check
    _
  $region15: #{gat_layer_forward.2} parent=0 // pred_check_branch
    %187 = sbr.rel (0) target = $region17
  $region16: #{gat_layer_forward.2} parent=0 // pred_region
    _
  $region17: #{gat_layer_forward.2} parent=0 // pred_fallthru
    _
  // Predicated region
  $region18: #{gat_layer_forward.2} parent=0 // pred_check
    _
  $region19: #{gat_layer_forward.2} parent=0 // pred_check_branch
    %189 = sbr.rel (0) target = $region21
  $region20: #{gat_layer_forward.2} parent=0 // pred_region
    _
  $region21: #{gat_layer_forward.2} parent=0 // pred_fallthru
    _
  // Predicated region
  $region22: #{gat_layer_forward.2} parent=0 // pred_check
    _
  $region23: #{gat_layer_forward.2} parent=0 // pred_check_branch
    %191 = sbr.rel (0) target = $region25
  $region24: #{gat_layer_forward.2} parent=0 // pred_region
    _
  $region25: #{gat_layer_forward.2} parent=0 // pred_fallthru
    _
  // Predicated region
  $region26: #{gat_layer_forward.2} parent=0 // pred_check
    _
  $region27: #{gat_layer_forward.2} parent=0 // pred_check_branch
    %193 = sbr.rel (0) target = $region29
  $region28: #{gat_layer_forward.2} parent=0 // pred_region
    _
  $region29: #{gat_layer_forward.2} parent=0 // pred_fallthru
    _

</llo_original>
